<compile_context>
chip_gen: v5e
topology: v5e:2x2
jax: 0.10.0
libtpu: 0.0.40
codegen_flags: <defaults>
</compile_context>

<pallas_src>
import math
import jax
import jax.numpy as jnp
from jax.experimental import pallas as pl
from jax.experimental.pallas import tpu as pltpu

EPS = 1e-5

N1, N1P = 400, 512   # layer1_state width, padded to 4*128
N2, N2P = 300, 384   # layer2_state / layer1_action width, padded to 3*128


def critic_kernel(state_ref, action_ref, w1s_ref, w2s_ref, w1a_ref, rows_ref,
                  out_ref):
    rows = rows_ref[...]                      # [9, 512] f32 packed row params
    b1s, g1, be1 = rows[0:1, :], rows[1:2, :], rows[2:3, :]           # [1, 512]
    b2s, g2, be2 = rows[3:4, :N2P], rows[4:5, :N2P], rows[5:6, :N2P]  # [1, 384]
    b1a = rows[6:7, :N2P]                                             # [1, 384]
    w3r = rows[7:8, :N2P]                                             # [1, 384]
    b3 = rows[8:9, 0:1]                                               # [1, 1]

    s = state_ref[...].astype(jnp.bfloat16)
    a = action_ref[...].astype(jnp.bfloat16)

    # ---- layer1_state + BatchNorm1d(400) (training-mode batch stats) + ReLU
    h1 = jnp.dot(s, w1s_ref[...], preferred_element_type=jnp.float32) + b1s
    mu1 = jnp.mean(h1, axis=0, keepdims=True)
    var1 = jnp.maximum(jnp.mean(h1 * h1, axis=0, keepdims=True) - mu1 * mu1, 0.0)
    scale1 = g1 * jax.lax.rsqrt(var1 + EPS)
    shift1 = be1 - mu1 * scale1
    h1 = jnp.maximum(h1 * scale1 + shift1, 0.0)

    # ---- layer2_state + BatchNorm1d(300) (no ReLU here, matching the module)
    h2 = jnp.dot(h1.astype(jnp.bfloat16), w2s_ref[...],
                 preferred_element_type=jnp.float32) + b2s
    mu2 = jnp.mean(h2, axis=0, keepdims=True)
    var2 = jnp.maximum(jnp.mean(h2 * h2, axis=0, keepdims=True) - mu2 * mu2, 0.0)
    scale2 = g2 * jax.lax.rsqrt(var2 + EPS)
    shift2 = be2 - mu2 * scale2
    h2 = h2 * scale2 + shift2

    # ---- layer1_action + ReLU
    ha = jnp.maximum(
        jnp.dot(a, w1a_ref[...], preferred_element_type=jnp.float32) + b1a, 0.0)

    # ---- combine, ReLU, final Linear(300, 1) as a lane reduction
    x = jnp.maximum(h2 + ha, 0.0)
    out_ref[...] = jnp.sum(x * w3r, axis=-1, keepdims=True) + b3


def critic_net_forward(state, action, prepped):
    B, SD = state.shape
    AD = action.shape[1]

    flops = 2 * B * (SD * N1P + N1P * N2P + AD * N2P + N2P) \
        + B * (6 * N1P + 10 * N2P)
    bytes_accessed = (
        (state.size + action.size + prepped["rows"].size + B) * 4
        + (prepped["w1s"].size + prepped["w2s"].size + prepped["w1a"].size) * 2
    )

    vmem = pl.BlockSpec(memory_space=pltpu.MemorySpace.VMEM)
    return pl.pallas_call(
        critic_kernel,
        out_shape=jax.ShapeDtypeStruct((B, 1), jnp.float32),
        in_specs=[vmem] * 6,
        out_specs=vmem,
        compiler_params=pltpu.CompilerParams(vmem_limit_bytes=32 * 1024 * 1024),
        cost_estimate=pl.CostEstimate(
            flops=flops, transcendentals=N1P + N2P,
            bytes_accessed=bytes_accessed),
    )(state, action, prepped["w1s"], prepped["w2s"], prepped["w1a"],
      prepped["rows"])


def init_params(key, state_dim, action_dim):
    """Deterministic init mirroring Critic_net.intial_parameters() (logical shapes)."""
    ks = jax.random.split(key, 8)

    def u(k, shape, lo, hi):
        return jax.random.uniform(k, shape, jnp.float32, lo, hi)

    b400 = 1.0 / math.sqrt(400.0)
    b300 = 1.0 / math.sqrt(300.0)
    ba = 1.0 / math.sqrt(float(action_dim))   # PyTorch Linear default for layer1_action

    return {
        "w1s": u(ks[0], (state_dim, N1), -b400, b400), "b1s": u(ks[1], (1, N1), -b400, b400),
        "g1": jnp.ones((1, N1), jnp.float32), "be1": jnp.zeros((1, N1), jnp.float32),
        "w2s": u(ks[2], (N1, N2), -b300, b300), "b2s": u(ks[3], (1, N2), -b300, b300),
        "g2": jnp.ones((1, N2), jnp.float32), "be2": jnp.zeros((1, N2), jnp.float32),
        "w1a": u(ks[4], (action_dim, N2), -ba, ba), "b1a": u(ks[5], (1, N2), -ba, ba),
        "w3": u(ks[6], (N2, 1), -0.003, 0.003), "b3": u(ks[7], (1, 1), -0.0003, 0.0003),
    }


def prepare_params(p):
    """Pad to lane multiples, cast matmul weights to bf16, pack row params."""
    w1s = jnp.pad(p["w1s"], ((0, 0), (0, N1P - N1))).astype(jnp.bfloat16)
    w2s = jnp.pad(p["w2s"], ((0, N1P - N1), (0, N2P - N2))).astype(jnp.bfloat16)
    w1a = jnp.pad(p["w1a"], ((0, 0), (0, N2P - N2))).astype(jnp.bfloat16)

    rows = jnp.zeros((9, N1P), jnp.float32)
    rows = rows.at[0, :N1].set(p["b1s"][0])
    rows = rows.at[1, :N1].set(p["g1"][0])
    rows = rows.at[2, :N1].set(p["be1"][0])
    rows = rows.at[3, :N2].set(p["b2s"][0])
    rows = rows.at[4, :N2].set(p["g2"][0])
    rows = rows.at[5, :N2].set(p["be2"][0])
    rows = rows.at[6, :N2].set(p["b1a"][0])
    rows = rows.at[7, :N2].set(p["w3"][:, 0])
    rows = rows.at[8, 0].set(p["b3"][0, 0])
    return {"w1s": w1s, "w2s": w2s, "w1a": w1a, "rows": rows}


def reference_forward(state, action, p):
    """Pure-JAX reference on logical (unpadded) params; bf16 dots, f32 elsewhere."""
    bf = jnp.bfloat16
    h1 = jnp.dot(state.astype(bf), p["w1s"].astype(bf),
                 preferred_element_type=jnp.float32) + p["b1s"]
    mu1 = h1.mean(0, keepdims=True)
    v1 = ((h1 - mu1) ** 2).mean(0, keepdims=True)
    h1 = jnp.maximum((h1 - mu1) * jax.lax.rsqrt(v1 + EPS) * p["g1"] + p["be1"], 0.0)
    h2 = jnp.dot(h1.astype(bf), p["w2s"].astype(bf),
                 preferred_element_type=jnp.float32) + p["b2s"]
    mu2 = h2.mean(0, keepdims=True)
    v2 = ((h2 - mu2) ** 2).mean(0, keepdims=True)
    h2 = (h2 - mu2) * jax.lax.rsqrt(v2 + EPS) * p["g2"] + p["be2"]
    ha = jnp.maximum(jnp.dot(action.astype(bf), p["w1a"].astype(bf),
                             preferred_element_type=jnp.float32) + p["b1a"], 0.0)
    x = jnp.maximum(h2 + ha, 0.0)
    return x @ p["w3"] + p["b3"]


if __name__ == "__main__":
    B, STATE_DIM, ACTION_DIM = 8, 16, 4

    key = jax.random.PRNGKey(0)
    k_state, k_action, k_params = jax.random.split(key, 3)

    state = jax.random.normal(k_state, (B, STATE_DIM), jnp.float32)
    action = jax.random.normal(k_action, (B, ACTION_DIM), jnp.float32)
    params = init_params(k_params, STATE_DIM, ACTION_DIM)
    prepped = prepare_params(params)

    out = critic_net_forward(state, action, prepped)
    out = jax.block_until_ready(out)

    ref = reference_forward(state, action, params)
    assert out.shape == (B, 1)
    assert jnp.allclose(out, ref, atol=1e-3, rtol=1e-2), (out, ref)
    print("KERNEL_OK")
</pallas_src>

<mosaic_0001>
module attributes {stable_mosaic.version = 11 : i64} {
  func.func @critic_kernel(%arg0: memref<8x16xf32, #tpu.memory_space<vmem>>, %arg1: memref<8x4xf32, #tpu.memory_space<vmem>>, %arg2: memref<16x512xbf16, #tpu.memory_space<vmem>>, %arg3: memref<512x384xbf16, #tpu.memory_space<vmem>>, %arg4: memref<4x384xbf16, #tpu.memory_space<vmem>>, %arg5: memref<9x512xf32, #tpu.memory_space<vmem>>, %arg6: memref<8x1xf32, #tpu.memory_space<vmem>>) attributes {dimension_semantics = [], scalar_prefetch = 0 : i64, scratch_operands = 0 : i64, tpu.core_type = #tpu.core_type<tc>} {
    %c0 = arith.constant 0 : index
    %c0_0 = arith.constant 0 : index
    %0 = vector.load %arg5[%c0, %c0_0] : memref<9x512xf32, #tpu.memory_space<vmem>>, vector<9x512xf32>
    %1 = vector.extract_strided_slice %0 {offsets = [0, 0], sizes = [1, 512], strides = [1, 1]} : vector<9x512xf32> to vector<1x512xf32>
    %2 = vector.extract_strided_slice %0 {offsets = [1, 0], sizes = [1, 512], strides = [1, 1]} : vector<9x512xf32> to vector<1x512xf32>
    %3 = vector.extract_strided_slice %0 {offsets = [2, 0], sizes = [1, 512], strides = [1, 1]} : vector<9x512xf32> to vector<1x512xf32>
    %4 = vector.extract_strided_slice %0 {offsets = [3, 0], sizes = [1, 384], strides = [1, 1]} : vector<9x512xf32> to vector<1x384xf32>
    %5 = vector.extract_strided_slice %0 {offsets = [4, 0], sizes = [1, 384], strides = [1, 1]} : vector<9x512xf32> to vector<1x384xf32>
    %6 = vector.extract_strided_slice %0 {offsets = [5, 0], sizes = [1, 384], strides = [1, 1]} : vector<9x512xf32> to vector<1x384xf32>
    %7 = vector.extract_strided_slice %0 {offsets = [6, 0], sizes = [1, 384], strides = [1, 1]} : vector<9x512xf32> to vector<1x384xf32>
    %8 = vector.extract_strided_slice %0 {offsets = [7, 0], sizes = [1, 384], strides = [1, 1]} : vector<9x512xf32> to vector<1x384xf32>
    %9 = vector.extract_strided_slice %0 {offsets = [8, 0], sizes = [1, 1], strides = [1, 1]} : vector<9x512xf32> to vector<1x1xf32>
    %c0_1 = arith.constant 0 : index
    %c0_2 = arith.constant 0 : index
    %10 = vector.load %arg0[%c0_1, %c0_2] : memref<8x16xf32, #tpu.memory_space<vmem>>, vector<8x16xf32>
    %11 = arith.truncf %10 : vector<8x16xf32> to vector<8x16xbf16>
    %c0_3 = arith.constant 0 : index
    %c0_4 = arith.constant 0 : index
    %12 = vector.load %arg1[%c0_3, %c0_4] : memref<8x4xf32, #tpu.memory_space<vmem>>, vector<8x4xf32>
    %13 = arith.truncf %12 : vector<8x4xf32> to vector<8x4xbf16>
    %c0_5 = arith.constant 0 : index
    %c0_6 = arith.constant 0 : index
    %14 = vector.load %arg2[%c0_5, %c0_6] : memref<16x512xbf16, #tpu.memory_space<vmem>>, vector<16x512xbf16>
    %cst = arith.constant dense<0.000000e+00> : vector<8x512xf32>
    %15 = tpu.matmul %11, %14, %cst {dimension_numbers = #tpu.dot_dimension_numbers<[1], [0], [0], [1], [0, 0, 1, 1], [], []>} : vector<8x16xbf16>, vector<16x512xbf16>, vector<8x512xf32> -> vector<8x512xf32>
    %16 = vector.broadcast %1 : vector<1x512xf32> to vector<8x512xf32>
    %17 = arith.addf %15, %16 : vector<8x512xf32>
    %cst_7 = arith.constant dense<0.000000e+00> : vector<512xf32>
    %18 = vector.multi_reduction <add>, %17, %cst_7 [0] : vector<8x512xf32> to vector<512xf32>
    %19 = vector.shape_cast %18 : vector<512xf32> to vector<1x512xf32>
    %cst_8 = arith.constant 8.000000e+00 : f32
    %20 = vector.broadcast %cst_8 : f32 to vector<1x512xf32>
    %21 = arith.divf %19, %20 : vector<1x512xf32>
    %22 = arith.mulf %17, %17 : vector<8x512xf32>
    %cst_9 = arith.constant dense<0.000000e+00> : vector<512xf32>
    %23 = vector.multi_reduction <add>, %22, %cst_9 [0] : vector<8x512xf32> to vector<512xf32>
    %24 = vector.shape_cast %23 : vector<512xf32> to vector<1x512xf32>
    %cst_10 = arith.constant 8.000000e+00 : f32
    %25 = vector.broadcast %cst_10 : f32 to vector<1x512xf32>
    %26 = arith.divf %24, %25 : vector<1x512xf32>
    %27 = arith.mulf %21, %21 : vector<1x512xf32>
    %28 = arith.subf %26, %27 : vector<1x512xf32>
    %cst_11 = arith.constant 0.000000e+00 : f32
    %29 = vector.broadcast %cst_11 : f32 to vector<1x512xf32>
    %30 = arith.maximumf %28, %29 : vector<1x512xf32>
    %cst_12 = arith.constant 9.99999974E-6 : f32
    %31 = vector.broadcast %cst_12 : f32 to vector<1x512xf32>
    %32 = arith.addf %30, %31 : vector<1x512xf32>
    %33 = math.rsqrt %32 : vector<1x512xf32>
    %34 = arith.mulf %2, %33 : vector<1x512xf32>
    %35 = arith.mulf %21, %34 : vector<1x512xf32>
    %36 = arith.subf %3, %35 : vector<1x512xf32>
    %37 = vector.broadcast %34 : vector<1x512xf32> to vector<8x512xf32>
    %38 = arith.mulf %17, %37 : vector<8x512xf32>
    %39 = vector.broadcast %36 : vector<1x512xf32> to vector<8x512xf32>
    %40 = arith.addf %38, %39 : vector<8x512xf32>
    %cst_13 = arith.constant 0.000000e+00 : f32
    %41 = vector.broadcast %cst_13 : f32 to vector<8x512xf32>
    %42 = arith.maximumf %40, %41 : vector<8x512xf32>
    %43 = arith.truncf %42 : vector<8x512xf32> to vector<8x512xbf16>
    %c0_14 = arith.constant 0 : index
    %c0_15 = arith.constant 0 : index
    %44 = vector.load %arg3[%c0_14, %c0_15] : memref<512x384xbf16, #tpu.memory_space<vmem>>, vector<512x384xbf16>
    %cst_16 = arith.constant dense<0.000000e+00> : vector<8x384xf32>
    %45 = tpu.matmul %43, %44, %cst_16 {dimension_numbers = #tpu.dot_dimension_numbers<[1], [0], [0], [1], [0, 0, 1, 1], [], []>} : vector<8x512xbf16>, vector<512x384xbf16>, vector<8x384xf32> -> vector<8x384xf32>
    %46 = vector.broadcast %4 : vector<1x384xf32> to vector<8x384xf32>
    %47 = arith.addf %45, %46 : vector<8x384xf32>
    %cst_17 = arith.constant dense<0.000000e+00> : vector<384xf32>
    %48 = vector.multi_reduction <add>, %47, %cst_17 [0] : vector<8x384xf32> to vector<384xf32>
    %49 = vector.shape_cast %48 : vector<384xf32> to vector<1x384xf32>
    %cst_18 = arith.constant 8.000000e+00 : f32
    %50 = vector.broadcast %cst_18 : f32 to vector<1x384xf32>
    %51 = arith.divf %49, %50 : vector<1x384xf32>
    %52 = arith.mulf %47, %47 : vector<8x384xf32>
    %cst_19 = arith.constant dense<0.000000e+00> : vector<384xf32>
    %53 = vector.multi_reduction <add>, %52, %cst_19 [0] : vector<8x384xf32> to vector<384xf32>
    %54 = vector.shape_cast %53 : vector<384xf32> to vector<1x384xf32>
    %cst_20 = arith.constant 8.000000e+00 : f32
    %55 = vector.broadcast %cst_20 : f32 to vector<1x384xf32>
    %56 = arith.divf %54, %55 : vector<1x384xf32>
    %57 = arith.mulf %51, %51 : vector<1x384xf32>
    %58 = arith.subf %56, %57 : vector<1x384xf32>
    %cst_21 = arith.constant 0.000000e+00 : f32
    %59 = vector.broadcast %cst_21 : f32 to vector<1x384xf32>
    %60 = arith.maximumf %58, %59 : vector<1x384xf32>
    %cst_22 = arith.constant 9.99999974E-6 : f32
    %61 = vector.broadcast %cst_22 : f32 to vector<1x384xf32>
    %62 = arith.addf %60, %61 : vector<1x384xf32>
    %63 = math.rsqrt %62 : vector<1x384xf32>
    %64 = arith.mulf %5, %63 : vector<1x384xf32>
    %65 = arith.mulf %51, %64 : vector<1x384xf32>
    %66 = arith.subf %6, %65 : vector<1x384xf32>
    %67 = vector.broadcast %64 : vector<1x384xf32> to vector<8x384xf32>
    %68 = arith.mulf %47, %67 : vector<8x384xf32>
    %69 = vector.broadcast %66 : vector<1x384xf32> to vector<8x384xf32>
    %70 = arith.addf %68, %69 : vector<8x384xf32>
    %c0_23 = arith.constant 0 : index
    %c0_24 = arith.constant 0 : index
    %71 = vector.load %arg4[%c0_23, %c0_24] : memref<4x384xbf16, #tpu.memory_space<vmem>>, vector<4x384xbf16>
    %cst_25 = arith.constant dense<0.000000e+00> : vector<8x384xf32>
    %72 = tpu.matmul %13, %71, %cst_25 {dimension_numbers = #tpu.dot_dimension_numbers<[1], [0], [0], [1], [0, 0, 1, 1], [], []>} : vector<8x4xbf16>, vector<4x384xbf16>, vector<8x384xf32> -> vector<8x384xf32>
    %73 = vector.broadcast %7 : vector<1x384xf32> to vector<8x384xf32>
    %74 = arith.addf %72, %73 : vector<8x384xf32>
    %cst_26 = arith.constant 0.000000e+00 : f32
    %75 = vector.broadcast %cst_26 : f32 to vector<8x384xf32>
    %76 = arith.maximumf %74, %75 : vector<8x384xf32>
    %77 = arith.addf %70, %76 : vector<8x384xf32>
    %cst_27 = arith.constant 0.000000e+00 : f32
    %78 = vector.broadcast %cst_27 : f32 to vector<8x384xf32>
    %79 = arith.maximumf %77, %78 : vector<8x384xf32>
    %80 = vector.broadcast %8 : vector<1x384xf32> to vector<8x384xf32>
    %81 = arith.mulf %79, %80 : vector<8x384xf32>
    %cst_28 = arith.constant dense<0.000000e+00> : vector<8xf32>
    %82 = vector.multi_reduction <add>, %81, %cst_28 [1] : vector<8x384xf32> to vector<8xf32>
    %83 = vector.shape_cast %82 : vector<8xf32> to vector<8x1xf32>
    %84 = vector.broadcast %9 : vector<1x1xf32> to vector<8x1xf32>
    %85 = arith.addf %83, %84 : vector<8x1xf32>
    %c0_29 = arith.constant 0 : index
    %c0_30 = arith.constant 0 : index
    %86 = vector.load %arg6[%c0_29, %c0_30] : memref<8x1xf32, #tpu.memory_space<vmem>>, vector<8x1xf32>
    tpu.vector_store %arg6[%c0_29, %c0_30], %85 {strides = array<i32>} : memref<8x1xf32, #tpu.memory_space<vmem>>, vector<8x1xf32>,
    return
  }
}

</mosaic_0001>

<llo_original>
// kernel: tpu_custom_call.1
$region0: #{tpu_custom_call.1}
  #allocation0 [shape = 'u32[]', space=smem, size = 0x4, offset = 0x4, fixed_abs, tag = 'smem constant byte address 0x4 - core index']
  #allocation1 [shape = 'u32[72,128]{1,0:T(1,128)}', space=vmem, size = 0x9000, scoped, tag = 'internal scratch']
  %s0 = inlined_call_operand.vmem [shape: f32[8,16], index: 0, kind: input, shape index: {}]
  %s1 = inlined_call_operand.vmem [shape: f32[8,4], index: 1, kind: input, shape index: {}]
  %s2 = inlined_call_operand.hbm [shape: bf16[16,512], index: 2, kind: input, shape index: {}]
  %s3 = inlined_call_operand.hbm [shape: bf16[512,384], index: 3, kind: input, shape index: {}]
  %s4 = inlined_call_operand.vmem [shape: bf16[4,384], index: 4, kind: input, shape index: {}]
  %s5 = inlined_call_operand.hbm [shape: f32[9,512], index: 5, kind: input, shape index: {}]
  %s6 = inlined_call_operand.vmem [shape: f32[8,1], index: 6, kind: output, shape index: {}]
  %s7 = sld [smem:[#allocation0]]
  $region46: #{tpu_custom_call.1} parent=0
    _
  %s9 = ssub.s32 1, %s7
  %s10 = scalar_select 0, %s9, %s7
  $region1: #{tpu_custom_call.1} parent=0
    #allocation2 [shape = 'u8[16384]{0}', space=vmem, size = 0x4000, scoped, tag = 'input window, operand 2, single buffered']
    #allocation3 [shape = 's32[1]{0}', space=sflag, size = 0x4, scoped, tag = 'scoped memory for tpu_custom_call.1']
    #allocation4 [shape = 'u8[393216]{0}', space=vmem, size = 0x60000, scoped, tag = 'input window, operand 3, single buffered']
    #allocation5 [shape = 's32[1]{0}', space=sflag, size = 0x4, scoped, tag = 'scoped memory for tpu_custom_call.1']
    #allocation6 [shape = 'u8[32768]{0}', space=vmem, size = 0x8000, scoped, tag = 'input window, operand 5, single buffered']
    %11 = vsyncpa [#allocation3], 0
    %12 = vsyncpa [#allocation5], 0
    // Predicated region
    $region2: #{tpu_custom_call.1} parent=1 // pred_check
      _
    $region3: #{tpu_custom_call.1} parent=1 // pred_check_branch
      %14 = sbr.rel (0) target = $region5
    $region4: #{tpu_custom_call.1} parent=1 // pred_region
      _
    $region5: #{tpu_custom_call.1} parent=1 // pred_fallthru
      _
    // Predicated region
    $region6: #{tpu_custom_call.1} parent=1 // pred_check
      _
    $region7: #{tpu_custom_call.1} parent=1 // pred_check_branch
      %16 = sbr.rel (0) target = $region9
    $region8: #{tpu_custom_call.1} parent=1 // pred_region
      _
    $region9: #{tpu_custom_call.1} parent=1 // pred_fallthru
      _
    // Predicated region
    $region10: #{tpu_custom_call.1} parent=1 // pred_check
      _
    $region11: #{tpu_custom_call.1} parent=1 // pred_check_branch
      %18 = sbr.rel (0) target = $region13
    $region12: #{tpu_custom_call.1} parent=1 // pred_region
      %20 = vsyncadd [#allocation3], 0
      %s21 = sshll.u32 %s2, 4
      %s22 = int_to_ptr.hbm [resolvable:$true] %s21
      %s23 = sshll.u32 [#allocation2], 4
      %s24 = int_to_ptr.vmem [resolvable:$true] %s23
      %29 = dma.hbm_to_vmem [thread:$0]  %s22, 512, %s24, [#allocation3], 256, 256, 16
    $region13: #{tpu_custom_call.1} parent=1 // pred_fallthru
      _
    // Predicated region
    $region14: #{tpu_custom_call.1} parent=1 // pred_check
      _
    $region15: #{tpu_custom_call.1} parent=1 // pred_check_branch
      %31 = sbr.rel (0) target = $region17
    $region16: #{tpu_custom_call.1} parent=1 // pred_region
      %33 = vsyncadd [#allocation5], 0
      %s34 = sshll.u32 %s3, 4
      %s35 = int_to_ptr.hbm [resolvable:$true] %s34
      %s36 = sshll.u32 [#allocation4], 4
      %s37 = int_to_ptr.vmem [resolvable:$true] %s36
      %42 = dma.hbm_to_vmem [thread:$0]  %s35, 12288, %s37, [#allocation5], 192, 192, 12
    $region17: #{tpu_custom_call.1} parent=1 // pred_fallthru
      _
    // Predicated region
    $region18: #{tpu_custom_call.1} parent=1 // pred_check
      _
    $region19: #{tpu_custom_call.1} parent=1 // pred_check_branch
      %44 = sbr.rel (0) target = $region21
    $region20: #{tpu_custom_call.1} parent=1 // pred_region
      _
    $region21: #{tpu_custom_call.1} parent=1 // pred_fallthru
      _
    // Predicated region
    $region22: #{tpu_custom_call.1} parent=1 // pred_check
      _
    $region23: #{tpu_custom_call.1} parent=1 // pred_check_branch
      %46 = sbr.rel (0) target = $region25
    $region24: #{tpu_custom_call.1} parent=1 // pred_region
      %48 = vsyncadd [#allocation5], 0
      %s49 = sshll.u32 %s5, 4
      %s50 = int_to_ptr.hbm [resolvable:$true] %s49
      %s51 = sshll.u32 [#allocation6], 4
      %s52 = int_to_ptr.vmem [resolvable:$true] %s51
      %57 = dma.hbm_to_vmem [thread:$0]  %s50, 1024, %s52, [#allocation5], 512, 512, 32
    $region25: #{tpu_custom_call.1} parent=1 // pred_fallthru
      _
    // Predicated region
    $region26: #{tpu_custom_call.1} parent=1 // pred_check
      _
    $region27: #{tpu_custom_call.1} parent=1 // pred_check_branch
      %59 = sbr.rel (0) target = $region29
    $region28: #{tpu_custom_call.1} parent=1 // pred_region
      %61 = dma.done [#allocation3], 512
    $region29: #{tpu_custom_call.1} parent=1 // pred_fallthru
      _
    // Predicated region
    $region30: #{tpu_custom_call.1} parent=1 // pred_check
      _
    $region31: #{tpu_custom_call.1} parent=1 // pred_check_branch
      %63 = sbr.rel (0) target = $region33
    $region32: #{tpu_custom_call.1} parent=1 // pred_region
      %65 = dma.done [#allocation5], 12288
    $region33: #{tpu_custom_call.1} parent=1 // pred_fallthru
      _
    // Predicated region
    $region34: #{tpu_custom_call.1} parent=1 // pred_check
      _
    $region35: #{tpu_custom_call.1} parent=1 // pred_check_branch
      %67 = sbr.rel (0) target = $region37
    $region36: #{tpu_custom_call.1} parent=1 // pred_region
      %69 = dma.done [#allocation5], 1024
    $region37: #{tpu_custom_call.1} parent=1 // pred_fallthru
      _
    %v71 = vld [vmem:[#allocation6] sm:$0xff]
    %v72 = vld [vmem:[#allocation6 + $0x8] sm:$0xff]
    %v73 = vld [vmem:[#allocation6 + $0x10] sm:$0xff]
    %v74 = vld [vmem:[#allocation6 + $0x18] sm:$0xff]
    %v75 = vld [vmem:[#allocation6 + $0x20] sm:$0x1]
    %v76 = vld [vmem:[%s0] sm:$0xff]
    %v77 = vpack.c.bf16 %v76, %v76
    %v78 = vld [vmem:[%s1] sm:$0xff]
    %v79 = vpack.c.bf16 %v78, %v78
    %v80 = vld [vmem:[#allocation2] sm:$0xff]
    %v81 = vld [vmem:[#allocation2 + $0x8] sm:$0xff]
    %v82 = vld [vmem:[#allocation2 + $0x10] sm:$0xff]
    %v83 = vld [vmem:[#allocation2 + $0x18] sm:$0xff]
    %v84 = vperm.slane %v71, 0
    %v85 = vperm.slane %v72, 0
    %v86 = vperm.slane %v73, 0
    %v87 = vperm.slane %v74, 0
    %v92 = vunpack.c.l.b16 %v80
    %v93 = vunpack.c.h.b16 %v80
    %v94 = vunpack.c.l.b16 %v81
    %v95 = vunpack.c.h.b16 %v81
    %v96 = vunpack.c.l.b16 %v82
    %v97 = vunpack.c.h.b16 %v82
    %v98 = vunpack.c.l.b16 %v83
    %v99 = vunpack.c.h.b16 %v83
    %v100 = vpack.c.b16 %v96, %v92
    %v101 = vpack.c.b16 %v97, %v93
    %v102 = vpack.c.b16 %v98, %v94
    %v103 = vpack.c.b16 %v99, %v95
    %vm108 = vcmask 130048
    %v110 = vsel %vm108, %v77, 0
    %112 = vmatpush.bf16.msra.mxu0 0
    %113 = vmatpush.bf16.msra.mxu0 0
    %114 = vmatpush.bf16.msra.mxu0 0
    %115 = vmatpush.bf16.msra.mxu0 0
    %116 = vmatpush.bf16.msra.mxu0 0
    %117 = vmatpush.bf16.msra.mxu0 0
    %118 = vmatpush.bf16.msra.mxu0 0
    %119 = vmatpush.bf16.msra.mxu0 %v100
    %120 = vmatmul.bf16.gmra.mxu0 %v110
    %v121 = vpop.f32.mrf.mxu0
    %v122 = vadd.f32 %v84, %v121
    %v123 = vpop.f32.mrf.mxu0
    %124 = vdwg.mxu0
    %125 = vmatpush.bf16.msra.mxu0 0
    %126 = vmatpush.bf16.msra.mxu0 0
    %127 = vmatpush.bf16.msra.mxu0 0
    %128 = vmatpush.bf16.msra.mxu0 0
    %129 = vmatpush.bf16.msra.mxu0 0
    %130 = vmatpush.bf16.msra.mxu0 0
    %131 = vmatpush.bf16.msra.mxu0 0
    %132 = vmatpush.bf16.msra.mxu0 %v101
    %133 = vmatmul.bf16.gmra.mxu0 %v110
    %v134 = vpop.f32.mrf.mxu0
    %v135 = vadd.f32 %v85, %v134
    %v136 = vpop.f32.mrf.mxu0
    %137 = vdwg.mxu0
    %138 = vmatpush.bf16.msra.mxu0 0
    %139 = vmatpush.bf16.msra.mxu0 0
    %140 = vmatpush.bf16.msra.mxu0 0
    %141 = vmatpush.bf16.msra.mxu0 0
    %142 = vmatpush.bf16.msra.mxu0 0
    %143 = vmatpush.bf16.msra.mxu0 0
    %144 = vmatpush.bf16.msra.mxu0 0
    %145 = vmatpush.bf16.msra.mxu0 %v102
    %146 = vmatmul.bf16.gmra.mxu0 %v110
    %v147 = vpop.f32.mrf.mxu0
    %v148 = vadd.f32 %v86, %v147
    %v149 = vpop.f32.mrf.mxu0
    %150 = vdwg.mxu0
    %151 = vmatpush.bf16.msra.mxu0 0
    %152 = vmatpush.bf16.msra.mxu0 0
    %153 = vmatpush.bf16.msra.mxu0 0
    %154 = vmatpush.bf16.msra.mxu0 0
    %155 = vmatpush.bf16.msra.mxu0 0
    %156 = vmatpush.bf16.msra.mxu0 0
    %157 = vmatpush.bf16.msra.mxu0 0
    %158 = vmatpush.bf16.msra.mxu0 %v103
    %159 = vmatmul.bf16.gmra.mxu0 %v110
    %v160 = vpop.f32.mrf.mxu0
    %v161 = vadd.f32 %v87, %v160
    %v162 = vpop.f32.mrf.mxu0
    %163 = vdwg.mxu0
    %v164 = vrot.slane %v122, 4
    %v165 = vadd.f32 %v122, %v164
    %v166 = vrot.slane %v165, 2
    %v167 = vadd.f32 %v165, %v166
    %v168 = vrot.slane %v167, 1
    %v169 = vadd.f32 %v167, %v168
    %v170 = vrot.slane %v135, 4
    %v171 = vadd.f32 %v135, %v170
    %v172 = vrot.slane %v171, 2
    %v173 = vadd.f32 %v171, %v172
    %v174 = vrot.slane %v173, 1
    %v175 = vadd.f32 %v173, %v174
    %v176 = vrot.slane %v148, 4
    %v177 = vadd.f32 %v148, %v176
    %v178 = vrot.slane %v177, 2
    %v179 = vadd.f32 %v177, %v178
    %v180 = vrot.slane %v179, 1
    %v181 = vadd.f32 %v179, %v180
    %v182 = vrot.slane %v161, 4
    %v183 = vadd.f32 %v161, %v182
    %v184 = vrot.slane %v183, 2
    %v185 = vadd.f32 %v183, %v184
    %v186 = vrot.slane %v185, 1
    %v187 = vadd.f32 %v185, %v186
    %v188 = vrcp.pop 8.0
    %v189 = vmul.f32 8.0, %v188
    %v190 = vsub.f32 1.0, %v189
    %v191 = vmul.f32 %v188, %v190
    %v192 = vadd.f32 %v188, %v191
    %vm193 = vweird.f32 %v188
    %v194 = vsel %vm193, %v188, %v192
    %v195 = vmul.f32 %v169, %v194
    %v196 = vmul.f32 %v175, %v194
    %v197 = vmul.f32 %v181, %v194
    %v198 = vmul.f32 %v187, %v194
    %v199 = vmul.f32 %v122, %v122
    %v200 = vmul.f32 %v135, %v135
    %v201 = vmul.f32 %v148, %v148
    %v202 = vmul.f32 %v161, %v161
    %v203 = vrot.slane %v199, 4
    %v204 = vadd.f32 %v199, %v203
    %v205 = vrot.slane %v204, 2
    %v206 = vadd.f32 %v204, %v205
    %v207 = vrot.slane %v206, 1
    %v208 = vadd.f32 %v206, %v207
    %v209 = vrot.slane %v200, 4
    %v210 = vadd.f32 %v200, %v209
    %v211 = vrot.slane %v210, 2
    %v212 = vadd.f32 %v210, %v211
    %v213 = vrot.slane %v212, 1
    %v214 = vadd.f32 %v212, %v213
    %v215 = vrot.slane %v201, 4
    %v216 = vadd.f32 %v201, %v215
    %v217 = vrot.slane %v216, 2
    %v218 = vadd.f32 %v216, %v217
    %v219 = vrot.slane %v218, 1
    %v220 = vadd.f32 %v218, %v219
    %v221 = vrot.slane %v202, 4
    %v222 = vadd.f32 %v202, %v221
    %v223 = vrot.slane %v222, 2
    %v224 = vadd.f32 %v222, %v223
    %v225 = vrot.slane %v224, 1
    %v226 = vadd.f32 %v224, %v225
    %v227 = vmul.f32 %v208, %v194
    %v228 = vmul.f32 %v214, %v194
    %v229 = vmul.f32 %v220, %v194
    %v230 = vmul.f32 %v226, %v194
    %v231 = vmul.f32 %v195, %v195
    %v232 = vmul.f32 %v196, %v196
    %v233 = vmul.f32 %v197, %v197
    %v234 = vmul.f32 %v198, %v198
    %v235 = vsub.f32 %v227, %v231
    %v236 = vsub.f32 %v228, %v232
    %v237 = vsub.f32 %v229, %v233
    %v238 = vsub.f32 %v230, %v234
    %v239 = vmax.f32 %v235, 0.0
    %v240 = vmax.f32 %v236, 0.0
    %v241 = vmax.f32 %v237, 0.0
    %v242 = vmax.f32 %v238, 0.0
    %v243 = vadd.f32 %v239, 1e-05
    %v244 = vadd.f32 %v240, 1e-05
    %v245 = vadd.f32 %v241, 1e-05
    %v246 = vadd.f32 %v242, 1e-05
    %v247 = vrsqrt.pop %v243
    %v248 = vmul.f32 %v247, %v243
    %v249 = vmul.f32 %v248, %v247
    %v250 = vmul.f32 0.5, %v249
    %v251 = vsub.f32 1.5, %v250
    %v252 = vmul.f32 %v247, %v251
    %vm253 = vweird.f32 %v243
    %vm254 = vweird.f32 %v247
    %vm255 = vmor %vm253, %vm254
    %v256 = vsel %vm255, %v247, %v252
    %v257 = vrsqrt.pop %v244
    %v258 = vmul.f32 %v257, %v244
    %v259 = vmul.f32 %v258, %v257
    %v260 = vmul.f32 0.5, %v259
    %v261 = vsub.f32 1.5, %v260
    %v262 = vmul.f32 %v257, %v261
    %vm263 = vweird.f32 %v244
    %vm264 = vweird.f32 %v257
    %vm265 = vmor %vm263, %vm264
    %v266 = vsel %vm265, %v257, %v262
    %v267 = vrsqrt.pop %v245
    %v268 = vmul.f32 %v267, %v245
    %v269 = vmul.f32 %v268, %v267
    %v270 = vmul.f32 0.5, %v269
    %v271 = vsub.f32 1.5, %v270
    %v272 = vmul.f32 %v267, %v271
    %vm273 = vweird.f32 %v245
    %vm274 = vweird.f32 %v267
    %vm275 = vmor %vm273, %vm274
    %v276 = vsel %vm275, %v267, %v272
    %v277 = vrsqrt.pop %v246
    %v278 = vmul.f32 %v277, %v246
    %v279 = vmul.f32 %v278, %v277
    %v280 = vmul.f32 0.5, %v279
    %v281 = vsub.f32 1.5, %v280
    %v282 = vmul.f32 %v277, %v281
    %vm283 = vweird.f32 %v246
    %vm284 = vweird.f32 %v277
    %vm285 = vmor %vm283, %vm284
    %v286 = vsel %vm285, %v277, %v282
    %v287 = vmul.f32 %v71, %v256
    %v288 = vmul.f32 %v72, %v266
    %v289 = vmul.f32 %v73, %v276
    %v290 = vmul.f32 %v74, %v286
    %v291 = vmul.f32 %v195, %v287
    %v292 = vmul.f32 %v196, %v288
    %v293 = vmul.f32 %v197, %v289
    %v294 = vmul.f32 %v198, %v290
    %v299 = vrot.slane %v291, 7
    %v300 = vrot.slane %v292, 7
    %v301 = vrot.slane %v293, 7
    %v302 = vrot.slane %v294, 7
    %v307 = vsub.f32 %v71, %v299
    %v308 = vsub.f32 %v72, %v300
    %v309 = vsub.f32 %v73, %v301
    %v310 = vsub.f32 %v74, %v302
    %v311 = vperm.slane %v287, 1
    %v312 = vperm.slane %v288, 1
    %v313 = vperm.slane %v289, 1
    %v314 = vperm.slane %v290, 1
    %v315 = vmul.f32 %v122, %v311
    %v316 = vmul.f32 %v135, %v312
    %v317 = vmul.f32 %v148, %v313
    %v318 = vmul.f32 %v161, %v314
    %v319 = vperm.slane %v307, 2
    %v320 = vperm.slane %v308, 2
    %v321 = vperm.slane %v309, 2
    %v322 = vperm.slane %v310, 2
    %v323 = vadd.f32 %v315, %v319
    %v324 = vadd.f32 %v316, %v320
    %v325 = vadd.f32 %v317, %v321
    %v326 = vadd.f32 %v318, %v322
    %v327 = vmax.f32 %v323, 0.0
    %v328 = vmax.f32 %v324, 0.0
    %v329 = vmax.f32 %v325, 0.0
    %v330 = vmax.f32 %v326, 0.0
    %v331 = vpack.c.bf16 %v327, %v327
    %v332 = vpack.c.bf16 %v328, %v328
    %v333 = vpack.c.bf16 %v329, %v329
    %v334 = vpack.c.bf16 %v330, %v330
    %v335 = vld [vmem:[#allocation4] sm:$0xff]
    %v336 = vld [vmem:[#allocation4 + $0x8] sm:$0xf]
    %v337 = vld [vmem:[#allocation4 + $0xc] sm:$0xff]
    %v338 = vld [vmem:[#allocation4 + $0x14] sm:$0xf]
    %v339 = vld [vmem:[#allocation4 + $0x18] sm:$0xff]
    %v340 = vld [vmem:[#allocation4 + $0x20] sm:$0xf]
    %v341 = vld [vmem:[#allocation4 + $0x24] sm:$0xff]
    %v342 = vld [vmem:[#allocation4 + $0x2c] sm:$0xf]
    %v343 = vld [vmem:[#allocation4 + $0x30] sm:$0xff]
    %v344 = vld [vmem:[#allocation4 + $0x38] sm:$0xf]
    %v345 = vld [vmem:[#allocation4 + $0x3c] sm:$0xff]
    %v346 = vld [vmem:[#allocation4 + $0x44] sm:$0xf]
    %v347 = vld [vmem:[#allocation4 + $0x48] sm:$0xff]
    %v348 = vld [vmem:[#allocation4 + $0x50] sm:$0xf]
    %v349 = vld [vmem:[#allocation4 + $0x54] sm:$0xff]
    %v350 = vld [vmem:[#allocation4 + $0x5c] sm:$0xf]
    %v351 = vld [vmem:[#allocation4 + $0x60] sm:$0xff]
    %v352 = vld [vmem:[#allocation4 + $0x68] sm:$0xf]
    %v353 = vld [vmem:[#allocation4 + $0x6c] sm:$0xff]
    %v354 = vld [vmem:[#allocation4 + $0x74] sm:$0xf]
    %v355 = vld [vmem:[#allocation4 + $0x78] sm:$0xff]
    %v356 = vld [vmem:[#allocation4 + $0x80] sm:$0xf]
    %v357 = vld [vmem:[#allocation4 + $0x84] sm:$0xff]
    %v358 = vld [vmem:[#allocation4 + $0x8c] sm:$0xf]
    %v359 = vld [vmem:[#allocation4 + $0x90] sm:$0xff]
    %v360 = vld [vmem:[#allocation4 + $0x98] sm:$0xf]
    %v361 = vld [vmem:[#allocation4 + $0x9c] sm:$0xff]
    %v362 = vld [vmem:[#allocation4 + $0xa4] sm:$0xf]
    %v363 = vld [vmem:[#allocation4 + $0xa8] sm:$0xff]
    %v364 = vld [vmem:[#allocation4 + $0xb0] sm:$0xf]
    %v365 = vld [vmem:[#allocation4 + $0xb4] sm:$0xff]
    %v366 = vld [vmem:[#allocation4 + $0xbc] sm:$0xf]
    %v367 = vld [vmem:[#allocation4 + $0xc0] sm:$0xff]
    %v368 = vld [vmem:[#allocation4 + $0xc8] sm:$0xf]
    %v369 = vld [vmem:[#allocation4 + $0xcc] sm:$0xff]
    %v370 = vld [vmem:[#allocation4 + $0xd4] sm:$0xf]
    %v371 = vld [vmem:[#allocation4 + $0xd8] sm:$0xff]
    %v372 = vld [vmem:[#allocation4 + $0xe0] sm:$0xf]
    %v373 = vld [vmem:[#allocation4 + $0xe4] sm:$0xff]
    %v374 = vld [vmem:[#allocation4 + $0xec] sm:$0xf]
    %v375 = vld [vmem:[#allocation4 + $0xf0] sm:$0xff]
    %v376 = vld [vmem:[#allocation4 + $0xf8] sm:$0xf]
    %v377 = vld [vmem:[#allocation4 + $0xfc] sm:$0xff]
    %v378 = vld [vmem:[#allocation4 + $0x104] sm:$0xf]
    %v379 = vld [vmem:[#allocation4 + $0x108] sm:$0xff]
    %v380 = vld [vmem:[#allocation4 + $0x110] sm:$0xf]
    %v381 = vld [vmem:[#allocation4 + $0x114] sm:$0xff]
    %v382 = vld [vmem:[#allocation4 + $0x11c] sm:$0xf]
    %v383 = vld [vmem:[#allocation4 + $0x120] sm:$0xff]
    %v384 = vld [vmem:[#allocation4 + $0x128] sm:$0xf]
    %v385 = vld [vmem:[#allocation4 + $0x12c] sm:$0xff]
    %v386 = vld [vmem:[#allocation4 + $0x134] sm:$0xf]
    %v387 = vld [vmem:[#allocation4 + $0x138] sm:$0xff]
    %v388 = vld [vmem:[#allocation4 + $0x140] sm:$0xf]
    %v389 = vld [vmem:[#allocation4 + $0x144] sm:$0xff]
    %v390 = vld [vmem:[#allocation4 + $0x14c] sm:$0xf]
    %v391 = vld [vmem:[#allocation4 + $0x150] sm:$0xff]
    %v392 = vld [vmem:[#allocation4 + $0x158] sm:$0xf]
    %v393 = vld [vmem:[#allocation4 + $0x15c] sm:$0xff]
    %v394 = vld [vmem:[#allocation4 + $0x164] sm:$0xf]
    %v395 = vld [vmem:[#allocation4 + $0x168] sm:$0xff]
    %v396 = vld [vmem:[#allocation4 + $0x170] sm:$0xf]
    %v397 = vld [vmem:[#allocation4 + $0x174] sm:$0xff]
    %v398 = vld [vmem:[#allocation4 + $0x17c] sm:$0xf]
    %v399 = vld [vmem:[#allocation4 + $0x180] sm:$0xff]
    %v400 = vld [vmem:[#allocation4 + $0x188] sm:$0xf]
    %v401 = vld [vmem:[#allocation4 + $0x18c] sm:$0xff]
    %v402 = vld [vmem:[#allocation4 + $0x194] sm:$0xf]
    %v403 = vld [vmem:[#allocation4 + $0x198] sm:$0xff]
    %v404 = vld [vmem:[#allocation4 + $0x1a0] sm:$0xf]
    %v405 = vld [vmem:[#allocation4 + $0x1a4] sm:$0xff]
    %v406 = vld [vmem:[#allocation4 + $0x1ac] sm:$0xf]
    %v407 = vld [vmem:[#allocation4 + $0x1b0] sm:$0xff]
    %v408 = vld [vmem:[#allocation4 + $0x1b8] sm:$0xf]
    %v409 = vld [vmem:[#allocation4 + $0x1bc] sm:$0xff]
    %v410 = vld [vmem:[#allocation4 + $0x1c4] sm:$0xf]
    %v411 = vld [vmem:[#allocation4 + $0x1c8] sm:$0xff]
    %v412 = vld [vmem:[#allocation4 + $0x1d0] sm:$0xf]
    %v413 = vld [vmem:[#allocation4 + $0x1d4] sm:$0xff]
    %v414 = vld [vmem:[#allocation4 + $0x1dc] sm:$0xf]
    %v415 = vld [vmem:[#allocation4 + $0x1e0] sm:$0xff]
    %v416 = vld [vmem:[#allocation4 + $0x1e8] sm:$0xf]
    %v417 = vld [vmem:[#allocation4 + $0x1ec] sm:$0xff]
    %v418 = vld [vmem:[#allocation4 + $0x1f4] sm:$0xf]
    %v419 = vld [vmem:[#allocation4 + $0x1f8] sm:$0xff]
    %v420 = vld [vmem:[#allocation4 + $0x200] sm:$0xf]
    %v421 = vld [vmem:[#allocation4 + $0x204] sm:$0xff]
    %v422 = vld [vmem:[#allocation4 + $0x20c] sm:$0xf]
    %v423 = vld [vmem:[#allocation4 + $0x210] sm:$0xff]
    %v424 = vld [vmem:[#allocation4 + $0x218] sm:$0xf]
    %v425 = vld [vmem:[#allocation4 + $0x21c] sm:$0xff]
    %v426 = vld [vmem:[#allocation4 + $0x224] sm:$0xf]
    %v427 = vld [vmem:[#allocation4 + $0x228] sm:$0xff]
    %v428 = vld [vmem:[#allocation4 + $0x230] sm:$0xf]
    %v429 = vld [vmem:[#allocation4 + $0x234] sm:$0xff]
    %v430 = vld [vmem:[#allocation4 + $0x23c] sm:$0xf]
    %v431 = vld [vmem:[#allocation4 + $0x240] sm:$0xff]
    %v432 = vld [vmem:[#allocation4 + $0x248] sm:$0xf]
    %v433 = vld [vmem:[#allocation4 + $0x24c] sm:$0xff]
    %v434 = vld [vmem:[#allocation4 + $0x254] sm:$0xf]
    %v435 = vld [vmem:[#allocation4 + $0x258] sm:$0xff]
    %v436 = vld [vmem:[#allocation4 + $0x260] sm:$0xf]
    %v437 = vld [vmem:[#allocation4 + $0x264] sm:$0xff]
    %v438 = vld [vmem:[#allocation4 + $0x26c] sm:$0xf]
    %v439 = vld [vmem:[#allocation4 + $0x270] sm:$0xff]
    %v440 = vld [vmem:[#allocation4 + $0x278] sm:$0xf]
    %v441 = vld [vmem:[#allocation4 + $0x27c] sm:$0xff]
    %v442 = vld [vmem:[#allocation4 + $0x284] sm:$0xf]
    %v443 = vld [vmem:[#allocation4 + $0x288] sm:$0xff]
    %v444 = vld [vmem:[#allocation4 + $0x290] sm:$0xf]
    %v445 = vld [vmem:[#allocation4 + $0x294] sm:$0xff]
    %v446 = vld [vmem:[#allocation4 + $0x29c] sm:$0xf]
    %v447 = vld [vmem:[#allocation4 + $0x2a0] sm:$0xff]
    %v448 = vld [vmem:[#allocation4 + $0x2a8] sm:$0xf]
    %v449 = vld [vmem:[#allocation4 + $0x2ac] sm:$0xff]
    %v450 = vld [vmem:[#allocation4 + $0x2b4] sm:$0xf]
    %v451 = vld [vmem:[#allocation4 + $0x2b8] sm:$0xff]
    %v452 = vld [vmem:[#allocation4 + $0x2c0] sm:$0xf]
    %v453 = vld [vmem:[#allocation4 + $0x2c4] sm:$0xff]
    %v454 = vld [vmem:[#allocation4 + $0x2cc] sm:$0xf]
    %v455 = vld [vmem:[#allocation4 + $0x2d0] sm:$0xff]
    %v456 = vld [vmem:[#allocation4 + $0x2d8] sm:$0xf]
    %v457 = vld [vmem:[#allocation4 + $0x2dc] sm:$0xff]
    %v458 = vld [vmem:[#allocation4 + $0x2e4] sm:$0xf]
    %v459 = vld [vmem:[#allocation4 + $0x2e8] sm:$0xff]
    %v460 = vld [vmem:[#allocation4 + $0x2f0] sm:$0xf]
    %v461 = vld [vmem:[#allocation4 + $0x2f4] sm:$0xff]
    %v462 = vld [vmem:[#allocation4 + $0x2fc] sm:$0xf]
    %v463 = vperm.slane %v71, 3
    %v464 = vperm.slane %v72, 3
    %v465 = vperm.slane %v73, 3
    %v594 = vunpack.c.l.b16 %v335
    %v595 = vunpack.c.h.b16 %v335
    %v596 = vunpack.c.l.b16 %v336
    %v597 = vunpack.c.l.b16 %v337
    %v598 = vunpack.c.h.b16 %v337
    %v599 = vunpack.c.l.b16 %v338
    %v600 = vunpack.c.l.b16 %v339
    %v601 = vunpack.c.h.b16 %v339
    %v602 = vunpack.c.l.b16 %v340
    %v603 = vunpack.c.l.b16 %v341
    %v604 = vunpack.c.h.b16 %v341
    %v605 = vunpack.c.l.b16 %v342
    %v606 = vunpack.c.l.b16 %v343
    %v607 = vunpack.c.h.b16 %v343
    %v608 = vunpack.c.l.b16 %v344
    %v609 = vunpack.c.l.b16 %v345
    %v610 = vunpack.c.h.b16 %v345
    %v611 = vunpack.c.l.b16 %v346
    %v612 = vunpack.c.l.b16 %v347
    %v613 = vunpack.c.h.b16 %v347
    %v614 = vunpack.c.l.b16 %v348
    %v615 = vunpack.c.l.b16 %v349
    %v616 = vunpack.c.h.b16 %v349
    %v617 = vunpack.c.l.b16 %v350
    %v618 = vunpack.c.l.b16 %v351
    %v619 = vunpack.c.h.b16 %v351
    %v620 = vunpack.c.l.b16 %v352
    %v621 = vunpack.c.l.b16 %v353
    %v622 = vunpack.c.h.b16 %v353
    %v623 = vunpack.c.l.b16 %v354
    %v624 = vunpack.c.l.b16 %v355
    %v625 = vunpack.c.h.b16 %v355
    %v626 = vunpack.c.l.b16 %v356
    %v627 = vunpack.c.l.b16 %v357
    %v628 = vunpack.c.h.b16 %v357
    %v629 = vunpack.c.l.b16 %v358
    %v630 = vunpack.c.l.b16 %v359
    %v631 = vunpack.c.h.b16 %v359
    %v632 = vunpack.c.l.b16 %v360
    %v633 = vunpack.c.l.b16 %v361
    %v634 = vunpack.c.h.b16 %v361
    %v635 = vunpack.c.l.b16 %v362
    %v636 = vunpack.c.l.b16 %v363
    %v637 = vunpack.c.h.b16 %v363
    %v638 = vunpack.c.l.b16 %v364
    %v639 = vunpack.c.l.b16 %v365
    %v640 = vunpack.c.h.b16 %v365
    %v641 = vunpack.c.l.b16 %v366
    %v642 = vunpack.c.l.b16 %v367
    %v643 = vunpack.c.h.b16 %v367
    %v644 = vunpack.c.l.b16 %v368
    %v645 = vunpack.c.l.b16 %v369
    %v646 = vunpack.c.h.b16 %v369
    %v647 = vunpack.c.l.b16 %v370
    %v648 = vunpack.c.l.b16 %v371
    %v649 = vunpack.c.h.b16 %v371
    %v650 = vunpack.c.l.b16 %v372
    %v651 = vunpack.c.l.b16 %v373
    %v652 = vunpack.c.h.b16 %v373
    %v653 = vunpack.c.l.b16 %v374
    %v654 = vunpack.c.l.b16 %v375
    %v655 = vunpack.c.h.b16 %v375
    %v656 = vunpack.c.l.b16 %v376
    %v657 = vunpack.c.l.b16 %v377
    %v658 = vunpack.c.h.b16 %v377
    %v659 = vunpack.c.l.b16 %v378
    %v660 = vunpack.c.l.b16 %v379
    %v661 = vunpack.c.h.b16 %v379
    %v662 = vunpack.c.l.b16 %v380
    %v663 = vunpack.c.l.b16 %v381
    %v664 = vunpack.c.h.b16 %v381
    %v665 = vunpack.c.l.b16 %v382
    %v666 = vunpack.c.l.b16 %v383
    %v667 = vunpack.c.h.b16 %v383
    %v668 = vunpack.c.l.b16 %v384
    %v669 = vunpack.c.l.b16 %v385
    %v670 = vunpack.c.h.b16 %v385
    %v671 = vunpack.c.l.b16 %v386
    %v672 = vunpack.c.l.b16 %v387
    %v673 = vunpack.c.h.b16 %v387
    %v674 = vunpack.c.l.b16 %v388
    %v675 = vunpack.c.l.b16 %v389
    %v676 = vunpack.c.h.b16 %v389
    %v677 = vunpack.c.l.b16 %v390
    %v678 = vunpack.c.l.b16 %v391
    %v679 = vunpack.c.h.b16 %v391
    %v680 = vunpack.c.l.b16 %v392
    %v681 = vunpack.c.l.b16 %v393
    %v682 = vunpack.c.h.b16 %v393
    %v683 = vunpack.c.l.b16 %v394
    %v684 = vunpack.c.l.b16 %v395
    %v685 = vunpack.c.h.b16 %v395
    %v686 = vunpack.c.l.b16 %v396
    %v687 = vunpack.c.l.b16 %v397
    %v688 = vunpack.c.h.b16 %v397
    %v689 = vunpack.c.l.b16 %v398
    %v690 = vunpack.c.l.b16 %v399
    %v691 = vunpack.c.h.b16 %v399
    %v692 = vunpack.c.l.b16 %v400
    %v693 = vunpack.c.l.b16 %v401
    %v694 = vunpack.c.h.b16 %v401
    %v695 = vunpack.c.l.b16 %v402
    %v696 = vunpack.c.l.b16 %v403
    %v697 = vunpack.c.h.b16 %v403
    %v698 = vunpack.c.l.b16 %v404
    %v699 = vunpack.c.l.b16 %v405
    %v700 = vunpack.c.h.b16 %v405
    %v701 = vunpack.c.l.b16 %v406
    %v702 = vunpack.c.l.b16 %v407
    %v703 = vunpack.c.h.b16 %v407
    %v704 = vunpack.c.l.b16 %v408
    %v705 = vunpack.c.l.b16 %v409
    %v706 = vunpack.c.h.b16 %v409
    %v707 = vunpack.c.l.b16 %v410
    %v708 = vunpack.c.l.b16 %v411
    %v709 = vunpack.c.h.b16 %v411
    %v710 = vunpack.c.l.b16 %v412
    %v711 = vunpack.c.l.b16 %v413
    %v712 = vunpack.c.h.b16 %v413
    %v713 = vunpack.c.l.b16 %v414
    %v714 = vunpack.c.l.b16 %v415
    %v715 = vunpack.c.h.b16 %v415
    %v716 = vunpack.c.l.b16 %v416
    %v717 = vunpack.c.l.b16 %v417
    %v718 = vunpack.c.h.b16 %v417
    %v719 = vunpack.c.l.b16 %v418
    %v720 = vunpack.c.l.b16 %v419
    %v721 = vunpack.c.h.b16 %v419
    %v722 = vunpack.c.l.b16 %v420
    %v723 = vunpack.c.l.b16 %v421
    %v724 = vunpack.c.h.b16 %v421
    %v725 = vunpack.c.l.b16 %v422
    %v726 = vunpack.c.l.b16 %v423
    %v727 = vunpack.c.h.b16 %v423
    %v728 = vunpack.c.l.b16 %v424
    %v729 = vunpack.c.l.b16 %v425
    %v730 = vunpack.c.h.b16 %v425
    %v731 = vunpack.c.l.b16 %v426
    %v732 = vunpack.c.l.b16 %v427
    %v733 = vunpack.c.h.b16 %v427
    %v734 = vunpack.c.l.b16 %v428
    %v735 = vunpack.c.l.b16 %v429
    %v736 = vunpack.c.h.b16 %v429
    %v737 = vunpack.c.l.b16 %v430
    %v738 = vunpack.c.l.b16 %v431
    %v739 = vunpack.c.h.b16 %v431
    %v740 = vunpack.c.l.b16 %v432
    %v741 = vunpack.c.l.b16 %v433
    %v742 = vunpack.c.h.b16 %v433
    %v743 = vunpack.c.l.b16 %v434
    %v744 = vunpack.c.l.b16 %v435
    %v745 = vunpack.c.h.b16 %v435
    %v746 = vunpack.c.l.b16 %v436
    %v747 = vunpack.c.l.b16 %v437
    %v748 = vunpack.c.h.b16 %v437
    %v749 = vunpack.c.l.b16 %v438
    %v750 = vunpack.c.l.b16 %v439
    %v751 = vunpack.c.h.b16 %v439
    %v752 = vunpack.c.l.b16 %v440
    %v753 = vunpack.c.l.b16 %v441
    %v754 = vunpack.c.h.b16 %v441
    %v755 = vunpack.c.l.b16 %v442
    %v756 = vunpack.c.l.b16 %v443
    %v757 = vunpack.c.h.b16 %v443
    %v758 = vunpack.c.l.b16 %v444
    %v759 = vunpack.c.l.b16 %v445
    %v760 = vunpack.c.h.b16 %v445
    %v761 = vunpack.c.l.b16 %v446
    %v762 = vunpack.c.l.b16 %v447
    %v763 = vunpack.c.h.b16 %v447
    %v764 = vunpack.c.l.b16 %v448
    %v765 = vunpack.c.l.b16 %v449
    %v766 = vunpack.c.h.b16 %v449
    %v767 = vunpack.c.l.b16 %v450
    %v768 = vunpack.c.l.b16 %v451
    %v769 = vunpack.c.h.b16 %v451
    %v770 = vunpack.c.l.b16 %v452
    %v771 = vunpack.c.l.b16 %v453
    %v772 = vunpack.c.h.b16 %v453
    %v773 = vunpack.c.l.b16 %v454
    %v774 = vunpack.c.l.b16 %v455
    %v775 = vunpack.c.h.b16 %v455
    %v776 = vunpack.c.l.b16 %v456
    %v777 = vunpack.c.l.b16 %v457
    %v778 = vunpack.c.h.b16 %v457
    %v779 = vunpack.c.l.b16 %v458
    %v780 = vunpack.c.l.b16 %v459
    %v781 = vunpack.c.h.b16 %v459
    %v782 = vunpack.c.l.b16 %v460
    %v783 = vunpack.c.l.b16 %v461
    %v784 = vunpack.c.h.b16 %v461
    %v785 = vunpack.c.l.b16 %v462
    %v786 = vpack.c.b16 %v597, %v594
    %v787 = vpack.c.b16 %v598, %v595
    %v788 = vpack.c.b16 %v599, %v596
    %v789 = vpack.c.b16 %v603, %v600
    %v790 = vpack.c.b16 %v604, %v601
    %v791 = vpack.c.b16 %v605, %v602
    %v792 = vpack.c.b16 %v609, %v606
    %v793 = vpack.c.b16 %v610, %v607
    %v794 = vpack.c.b16 %v611, %v608
    %v795 = vpack.c.b16 %v615, %v612
    %v796 = vpack.c.b16 %v616, %v613
    %v797 = vpack.c.b16 %v617, %v614
    %v798 = vpack.c.b16 %v621, %v618
    %v799 = vpack.c.b16 %v622, %v619
    %v800 = vpack.c.b16 %v623, %v620
    %v801 = vpack.c.b16 %v627, %v624
    %v802 = vpack.c.b16 %v628, %v625
    %v803 = vpack.c.b16 %v629, %v626
    %v804 = vpack.c.b16 %v633, %v630
    %v805 = vpack.c.b16 %v634, %v631
    %v806 = vpack.c.b16 %v635, %v632
    %v807 = vpack.c.b16 %v639, %v636
    %v808 = vpack.c.b16 %v640, %v637
    %v809 = vpack.c.b16 %v641, %v638
    %v810 = vpack.c.b16 %v645, %v642
    %v811 = vpack.c.b16 %v646, %v643
    %v812 = vpack.c.b16 %v647, %v644
    %v813 = vpack.c.b16 %v651, %v648
    %v814 = vpack.c.b16 %v652, %v649
    %v815 = vpack.c.b16 %v653, %v650
    %v816 = vpack.c.b16 %v657, %v654
    %v817 = vpack.c.b16 %v658, %v655
    %v818 = vpack.c.b16 %v659, %v656
    %v819 = vpack.c.b16 %v663, %v660
    %v820 = vpack.c.b16 %v664, %v661
    %v821 = vpack.c.b16 %v665, %v662
    %v822 = vpack.c.b16 %v669, %v666
    %v823 = vpack.c.b16 %v670, %v667
    %v824 = vpack.c.b16 %v671, %v668
    %v825 = vpack.c.b16 %v675, %v672
    %v826 = vpack.c.b16 %v676, %v673
    %v827 = vpack.c.b16 %v677, %v674
    %v828 = vpack.c.b16 %v681, %v678
    %v829 = vpack.c.b16 %v682, %v679
    %v830 = vpack.c.b16 %v683, %v680
    %v831 = vpack.c.b16 %v687, %v684
    %v832 = vpack.c.b16 %v688, %v685
    %v833 = vpack.c.b16 %v689, %v686
    %v834 = vpack.c.b16 %v693, %v690
    %v835 = vpack.c.b16 %v694, %v691
    %v836 = vpack.c.b16 %v695, %v692
    %v837 = vpack.c.b16 %v699, %v696
    %v838 = vpack.c.b16 %v700, %v697
    %v839 = vpack.c.b16 %v701, %v698
    %v840 = vpack.c.b16 %v705, %v702
    %v841 = vpack.c.b16 %v706, %v703
    %v842 = vpack.c.b16 %v707, %v704
    %v843 = vpack.c.b16 %v711, %v708
    %v844 = vpack.c.b16 %v712, %v709
    %v845 = vpack.c.b16 %v713, %v710
    %v846 = vpack.c.b16 %v717, %v714
    %v847 = vpack.c.b16 %v718, %v715
    %v848 = vpack.c.b16 %v719, %v716
    %v849 = vpack.c.b16 %v723, %v720
    %v850 = vpack.c.b16 %v724, %v721
    %v851 = vpack.c.b16 %v725, %v722
    %v852 = vpack.c.b16 %v729, %v726
    %v853 = vpack.c.b16 %v730, %v727
    %v854 = vpack.c.b16 %v731, %v728
    %v855 = vpack.c.b16 %v735, %v732
    %v856 = vpack.c.b16 %v736, %v733
    %v857 = vpack.c.b16 %v737, %v734
    %v858 = vpack.c.b16 %v741, %v738
    %v859 = vpack.c.b16 %v742, %v739
    %v860 = vpack.c.b16 %v743, %v740
    %v861 = vpack.c.b16 %v747, %v744
    %v862 = vpack.c.b16 %v748, %v745
    %v863 = vpack.c.b16 %v749, %v746
    %v864 = vpack.c.b16 %v753, %v750
    %v865 = vpack.c.b16 %v754, %v751
    %v866 = vpack.c.b16 %v755, %v752
    %v867 = vpack.c.b16 %v759, %v756
    %v868 = vpack.c.b16 %v760, %v757
    %v869 = vpack.c.b16 %v761, %v758
    %v870 = vpack.c.b16 %v765, %v762
    %v871 = vpack.c.b16 %v766, %v763
    %v872 = vpack.c.b16 %v767, %v764
    %v873 = vpack.c.b16 %v771, %v768
    %v874 = vpack.c.b16 %v772, %v769
    %v875 = vpack.c.b16 %v773, %v770
    %v876 = vpack.c.b16 %v777, %v774
    %v877 = vpack.c.b16 %v778, %v775
    %v878 = vpack.c.b16 %v779, %v776
    %v879 = vpack.c.b16 %v783, %v780
    %v880 = vpack.c.b16 %v784, %v781
    %v881 = vpack.c.b16 %v785, %v782
    %978 = vmatpush.bf16.msra.mxu0 %v807
    %979 = vmatpush.bf16.msra.mxu0 %v804
    %980 = vmatpush.bf16.msra.mxu0 %v801
    %981 = vmatpush.bf16.msra.mxu0 %v798
    %982 = vmatpush.bf16.msra.mxu0 %v795
    %983 = vmatpush.bf16.msra.mxu0 %v792
    %984 = vmatpush.bf16.msra.mxu0 %v789
    %985 = vmatpush.bf16.msra.mxu0 %v786
    %986 = vmatmul.bf16.gmra.mxu0 %v331
    %v987 = vpop.f32.mrf.mxu0
    %v988 = vadd.f32 %v463, %v987
    %v989 = vpop.f32.mrf.mxu0
    %990 = vdwg.mxu0
    %991 = vmatpush.bf16.msra.mxu0 %v831
    %992 = vmatpush.bf16.msra.mxu0 %v828
    %993 = vmatpush.bf16.msra.mxu0 %v825
    %994 = vmatpush.bf16.msra.mxu0 %v822
    %995 = vmatpush.bf16.msra.mxu0 %v819
    %996 = vmatpush.bf16.msra.mxu0 %v816
    %997 = vmatpush.bf16.msra.mxu0 %v813
    %998 = vmatpush.bf16.msra.mxu0 %v810
    %999 = vmatmul.bf16.gmra.mxu0 %v332
    %v1000 = vpop.f32.mrf.mxu0
    %v1001 = vadd.f32 %v988, %v1000
    %v1002 = vpop.f32.mrf.mxu0
    %1003 = vdwg.mxu0
    %1004 = vmatpush.bf16.msra.mxu0 %v855
    %1005 = vmatpush.bf16.msra.mxu0 %v852
    %1006 = vmatpush.bf16.msra.mxu0 %v849
    %1007 = vmatpush.bf16.msra.mxu0 %v846
    %1008 = vmatpush.bf16.msra.mxu0 %v843
    %1009 = vmatpush.bf16.msra.mxu0 %v840
    %1010 = vmatpush.bf16.msra.mxu0 %v837
    %1011 = vmatpush.bf16.msra.mxu0 %v834
    %1012 = vmatmul.bf16.gmra.mxu0 %v333
    %v1013 = vpop.f32.mrf.mxu0
    %v1014 = vadd.f32 %v1001, %v1013
    %v1015 = vpop.f32.mrf.mxu0
    %1016 = vdwg.mxu0
    %1017 = vmatpush.bf16.msra.mxu0 %v879
    %1018 = vmatpush.bf16.msra.mxu0 %v876
    %1019 = vmatpush.bf16.msra.mxu0 %v873
    %1020 = vmatpush.bf16.msra.mxu0 %v870
    %1021 = vmatpush.bf16.msra.mxu0 %v867
    %1022 = vmatpush.bf16.msra.mxu0 %v864
    %1023 = vmatpush.bf16.msra.mxu0 %v861
    %1024 = vmatpush.bf16.msra.mxu0 %v858
    %1025 = vmatmul.bf16.gmra.mxu0 %v334
    %v1026 = vpop.f32.mrf.mxu0
    %v1027 = vadd.f32 %v1014, %v1026
    %v1028 = vpop.f32.mrf.mxu0
    %1029 = vdwg.mxu0
    %1030 = vmatpush.bf16.msra.mxu0 %v808
    %1031 = vmatpush.bf16.msra.mxu0 %v805
    %1032 = vmatpush.bf16.msra.mxu0 %v802
    %1033 = vmatpush.bf16.msra.mxu0 %v799
    %1034 = vmatpush.bf16.msra.mxu0 %v796
    %1035 = vmatpush.bf16.msra.mxu0 %v793
    %1036 = vmatpush.bf16.msra.mxu0 %v790
    %1037 = vmatpush.bf16.msra.mxu0 %v787
    %1038 = vmatmul.bf16.gmra.mxu0 %v331
    %v1039 = vpop.f32.mrf.mxu0
    %v1040 = vadd.f32 %v464, %v1039
    %v1041 = vpop.f32.mrf.mxu0
    %1042 = vdwg.mxu0
    %1043 = vmatpush.bf16.msra.mxu0 %v832
    %1044 = vmatpush.bf16.msra.mxu0 %v829
    %1045 = vmatpush.bf16.msra.mxu0 %v826
    %1046 = vmatpush.bf16.msra.mxu0 %v823
    %1047 = vmatpush.bf16.msra.mxu0 %v820
    %1048 = vmatpush.bf16.msra.mxu0 %v817
    %1049 = vmatpush.bf16.msra.mxu0 %v814
    %1050 = vmatpush.bf16.msra.mxu0 %v811
    %1051 = vmatmul.bf16.gmra.mxu0 %v332
    %v1052 = vpop.f32.mrf.mxu0
    %v1053 = vadd.f32 %v1040, %v1052
    %v1054 = vpop.f32.mrf.mxu0
    %1055 = vdwg.mxu0
    %1056 = vmatpush.bf16.msra.mxu0 %v856
    %1057 = vmatpush.bf16.msra.mxu0 %v853
    %1058 = vmatpush.bf16.msra.mxu0 %v850
    %1059 = vmatpush.bf16.msra.mxu0 %v847
    %1060 = vmatpush.bf16.msra.mxu0 %v844
    %1061 = vmatpush.bf16.msra.mxu0 %v841
    %1062 = vmatpush.bf16.msra.mxu0 %v838
    %1063 = vmatpush.bf16.msra.mxu0 %v835
    %1064 = vmatmul.bf16.gmra.mxu0 %v333
    %v1065 = vpop.f32.mrf.mxu0
    %v1066 = vadd.f32 %v1053, %v1065
    %v1067 = vpop.f32.mrf.mxu0
    %1068 = vdwg.mxu0
    %1069 = vmatpush.bf16.msra.mxu0 %v880
    %1070 = vmatpush.bf16.msra.mxu0 %v877
    %1071 = vmatpush.bf16.msra.mxu0 %v874
    %1072 = vmatpush.bf16.msra.mxu0 %v871
    %1073 = vmatpush.bf16.msra.mxu0 %v868
    %1074 = vmatpush.bf16.msra.mxu0 %v865
    %1075 = vmatpush.bf16.msra.mxu0 %v862
    %1076 = vmatpush.bf16.msra.mxu0 %v859
    %1077 = vmatmul.bf16.gmra.mxu0 %v334
    %v1078 = vpop.f32.mrf.mxu0
    %v1079 = vadd.f32 %v1066, %v1078
    %v1080 = vpop.f32.mrf.mxu0
    %1081 = vdwg.mxu0
    %1082 = vmatpush.bf16.msra.mxu0 %v809
    %1083 = vmatpush.bf16.msra.mxu0 %v806
    %1084 = vmatpush.bf16.msra.mxu0 %v803
    %1085 = vmatpush.bf16.msra.mxu0 %v800
    %1086 = vmatpush.bf16.msra.mxu0 %v797
    %1087 = vmatpush.bf16.msra.mxu0 %v794
    %1088 = vmatpush.bf16.msra.mxu0 %v791
    %1089 = vmatpush.bf16.msra.mxu0 %v788
    %1090 = vmatmul.bf16.gmra.mxu0 %v331
    %v1091 = vpop.f32.mrf.mxu0
    %v1092 = vadd.f32 %v465, %v1091
    %v1093 = vpop.f32.mrf.mxu0
    %1094 = vdwg.mxu0
    %1095 = vmatpush.bf16.msra.mxu0 %v833
    %1096 = vmatpush.bf16.msra.mxu0 %v830
    %1097 = vmatpush.bf16.msra.mxu0 %v827
    %1098 = vmatpush.bf16.msra.mxu0 %v824
    %1099 = vmatpush.bf16.msra.mxu0 %v821
    %1100 = vmatpush.bf16.msra.mxu0 %v818
    %1101 = vmatpush.bf16.msra.mxu0 %v815
    %1102 = vmatpush.bf16.msra.mxu0 %v812
    %1103 = vmatmul.bf16.gmra.mxu0 %v332
    %v1104 = vpop.f32.mrf.mxu0
    %v1105 = vadd.f32 %v1092, %v1104
    %v1106 = vpop.f32.mrf.mxu0
    %1107 = vdwg.mxu0
    %1108 = vmatpush.bf16.msra.mxu0 %v857
    %1109 = vmatpush.bf16.msra.mxu0 %v854
    %1110 = vmatpush.bf16.msra.mxu0 %v851
    %1111 = vmatpush.bf16.msra.mxu0 %v848
    %1112 = vmatpush.bf16.msra.mxu0 %v845
    %1113 = vmatpush.bf16.msra.mxu0 %v842
    %1114 = vmatpush.bf16.msra.mxu0 %v839
    %1115 = vmatpush.bf16.msra.mxu0 %v836
    %1116 = vmatmul.bf16.gmra.mxu0 %v333
    %v1117 = vpop.f32.mrf.mxu0
    %v1118 = vadd.f32 %v1105, %v1117
    %v1119 = vpop.f32.mrf.mxu0
    %1120 = vdwg.mxu0
    %1121 = vmatpush.bf16.msra.mxu0 %v881
    %1122 = vmatpush.bf16.msra.mxu0 %v878
    %1123 = vmatpush.bf16.msra.mxu0 %v875
    %1124 = vmatpush.bf16.msra.mxu0 %v872
    %1125 = vmatpush.bf16.msra.mxu0 %v869
    %1126 = vmatpush.bf16.msra.mxu0 %v866
    %1127 = vmatpush.bf16.msra.mxu0 %v863
    %1128 = vmatpush.bf16.msra.mxu0 %v860
    %1129 = vmatmul.bf16.gmra.mxu0 %v334
    %v1130 = vpop.f32.mrf.mxu0
    %v1131 = vadd.f32 %v1118, %v1130
    %v1132 = vpop.f32.mrf.mxu0
    %1133 = vdwg.mxu0
    %v1134 = vrot.slane %v1027, 4
    %v1135 = vadd.f32 %v1027, %v1134
    %v1136 = vrot.slane %v1135, 2
    %v1137 = vadd.f32 %v1135, %v1136
    %v1138 = vrot.slane %v1137, 1
    %v1139 = vadd.f32 %v1137, %v1138
    %v1140 = vrot.slane %v1079, 4
    %v1141 = vadd.f32 %v1079, %v1140
    %v1142 = vrot.slane %v1141, 2
    %v1143 = vadd.f32 %v1141, %v1142
    %v1144 = vrot.slane %v1143, 1
    %v1145 = vadd.f32 %v1143, %v1144
    %v1146 = vrot.slane %v1131, 4
    %v1147 = vadd.f32 %v1131, %v1146
    %v1148 = vrot.slane %v1147, 2
    %v1149 = vadd.f32 %v1147, %v1148
    %v1150 = vrot.slane %v1149, 1
    %v1151 = vadd.f32 %v1149, %v1150
    %v1152 = vmul.f32 %v1139, %v194
    %v1153 = vmul.f32 %v1145, %v194
    %v1154 = vmul.f32 %v1151, %v194
    %v1155 = vmul.f32 %v1027, %v1027
    %v1156 = vmul.f32 %v1079, %v1079
    %v1157 = vmul.f32 %v1131, %v1131
    %v1158 = vrot.slane %v1155, 4
    %v1159 = vadd.f32 %v1155, %v1158
    %v1160 = vrot.slane %v1159, 2
    %v1161 = vadd.f32 %v1159, %v1160
    %v1162 = vrot.slane %v1161, 1
    %v1163 = vadd.f32 %v1161, %v1162
    %v1164 = vrot.slane %v1156, 4
    %v1165 = vadd.f32 %v1156, %v1164
    %v1166 = vrot.slane %v1165, 2
    %v1167 = vadd.f32 %v1165, %v1166
    %v1168 = vrot.slane %v1167, 1
    %v1169 = vadd.f32 %v1167, %v1168
    %v1170 = vrot.slane %v1157, 4
    %v1171 = vadd.f32 %v1157, %v1170
    %v1172 = vrot.slane %v1171, 2
    %v1173 = vadd.f32 %v1171, %v1172
    %v1174 = vrot.slane %v1173, 1
    %v1175 = vadd.f32 %v1173, %v1174
    %v1176 = vmul.f32 %v1163, %v194
    %v1177 = vmul.f32 %v1169, %v194
    %v1178 = vmul.f32 %v1175, %v194
    %v1179 = vmul.f32 %v1152, %v1152
    %v1180 = vmul.f32 %v1153, %v1153
    %v1181 = vmul.f32 %v1154, %v1154
    %v1182 = vsub.f32 %v1176, %v1179
    %v1183 = vsub.f32 %v1177, %v1180
    %v1184 = vsub.f32 %v1178, %v1181
    %v1185 = vmax.f32 %v1182, 0.0
    %v1186 = vmax.f32 %v1183, 0.0
    %v1187 = vmax.f32 %v1184, 0.0
    %v1188 = vadd.f32 %v1185, 1e-05
    %v1189 = vadd.f32 %v1186, 1e-05
    %v1190 = vadd.f32 %v1187, 1e-05
    %v1191 = vrsqrt.pop %v1188
    %v1192 = vmul.f32 %v1191, %v1188
    %v1193 = vmul.f32 %v1192, %v1191
    %v1194 = vmul.f32 0.5, %v1193
    %v1195 = vsub.f32 1.5, %v1194
    %v1196 = vmul.f32 %v1191, %v1195
    %vm1197 = vweird.f32 %v1188
    %vm1198 = vweird.f32 %v1191
    %vm1199 = vmor %vm1197, %vm1198
    %v1200 = vsel %vm1199, %v1191, %v1196
    %v1201 = vrsqrt.pop %v1189
    %v1202 = vmul.f32 %v1201, %v1189
    %v1203 = vmul.f32 %v1202, %v1201
    %v1204 = vmul.f32 0.5, %v1203
    %v1205 = vsub.f32 1.5, %v1204
    %v1206 = vmul.f32 %v1201, %v1205
    %vm1207 = vweird.f32 %v1189
    %vm1208 = vweird.f32 %v1201
    %vm1209 = vmor %vm1207, %vm1208
    %v1210 = vsel %vm1209, %v1201, %v1206
    %v1211 = vrsqrt.pop %v1190
    %v1212 = vmul.f32 %v1211, %v1190
    %v1213 = vmul.f32 %v1212, %v1211
    %v1214 = vmul.f32 0.5, %v1213
    %v1215 = vsub.f32 1.5, %v1214
    %v1216 = vmul.f32 %v1211, %v1215
    %vm1217 = vweird.f32 %v1190
    %vm1218 = vweird.f32 %v1211
    %vm1219 = vmor %vm1217, %vm1218
    %v1220 = vsel %vm1219, %v1211, %v1216
    %v1221 = vmul.f32 %v71, %v1200
    %v1222 = vmul.f32 %v72, %v1210
    %v1223 = vmul.f32 %v73, %v1220
    %v1224 = vmul.f32 %v1152, %v1221
    %v1225 = vmul.f32 %v1153, %v1222
    %v1226 = vmul.f32 %v1154, %v1223
    %v1230 = vrot.slane %v1224, 7
    %v1231 = vrot.slane %v1225, 7
    %v1232 = vrot.slane %v1226, 7
    %v1236 = vsub.f32 %v71, %v1230
    %v1237 = vsub.f32 %v72, %v1231
    %v1238 = vsub.f32 %v73, %v1232
    %v1239 = vperm.slane %v1221, 4
    %v1240 = vperm.slane %v1222, 4
    %v1241 = vperm.slane %v1223, 4
    %v1242 = vmul.f32 %v1027, %v1239
    %v1243 = vmul.f32 %v1079, %v1240
    %v1244 = vmul.f32 %v1131, %v1241
    %v1245 = vperm.slane %v1236, 5
    %v1246 = vperm.slane %v1237, 5
    %v1247 = vperm.slane %v1238, 5
    %v1248 = vadd.f32 %v1242, %v1245
    %v1249 = vadd.f32 %v1243, %v1246
    %v1250 = vadd.f32 %v1244, %v1247
    %v1251 = vld [vmem:[%s4] sm:$0x3f]
    %v1252 = vperm.slane %v71, 6
    %v1253 = vperm.slane %v72, 6
    %v1254 = vperm.slane %v73, 6
    %1256 = vst [vmem:[#allocation1] ss:$4 sm:$0xff] %v1251
    %v1257 = vld.sshfl [vmem:[#allocation1] sm:$0xff pattern:$0x73625140]
    %v1258 = vld.sshfl [vmem:[#allocation1 + $0x8] sm:$0xff pattern:$0x73625140]
    %v1259 = vld.sshfl [vmem:[#allocation1 + $0x10] sm:$0xff pattern:$0x73625140]
    %vm1260 = vcmask 31744
    %v1262 = vsel %vm1260, %v79, 0
    %vm1264 = vcmask 1041408
    %v1265 = vsel %vm1264, %v1257, 0
    %v1267 = vsel %vm1264, %v1258, 0
    %v1269 = vsel %vm1264, %v1259, 0
    %1271 = vmatpush.bf16.msra.mxu0 0
    %1272 = vmatpush.bf16.msra.mxu0 0
    %1273 = vmatpush.bf16.msra.mxu0 0
    %1274 = vmatpush.bf16.msra.mxu0 0
    %1275 = vmatpush.bf16.msra.mxu0 0
    %1276 = vmatpush.bf16.msra.mxu0 0
    %1277 = vmatpush.bf16.msra.mxu0 0
    %1278 = vmatpush.bf16.msra.mxu0 %v1265
    %1279 = vmatmul.bf16.gmra.mxu0 %v1262
    %v1280 = vpop.f32.mrf.mxu0
    %v1281 = vadd.f32 %v1252, %v1280
    %v1282 = vpop.f32.mrf.mxu0
    %1283 = vdwg.mxu0
    %1284 = vmatpush.bf16.msra.mxu0 0
    %1285 = vmatpush.bf16.msra.mxu0 0
    %1286 = vmatpush.bf16.msra.mxu0 0
    %1287 = vmatpush.bf16.msra.mxu0 0
    %1288 = vmatpush.bf16.msra.mxu0 0
    %1289 = vmatpush.bf16.msra.mxu0 0
    %1290 = vmatpush.bf16.msra.mxu0 0
    %1291 = vmatpush.bf16.msra.mxu0 %v1267
    %1292 = vmatmul.bf16.gmra.mxu0 %v1262
    %v1293 = vpop.f32.mrf.mxu0
    %v1294 = vadd.f32 %v1253, %v1293
    %v1295 = vpop.f32.mrf.mxu0
    %1296 = vdwg.mxu0
    %1297 = vmatpush.bf16.msra.mxu0 0
    %1298 = vmatpush.bf16.msra.mxu0 0
    %1299 = vmatpush.bf16.msra.mxu0 0
    %1300 = vmatpush.bf16.msra.mxu0 0
    %1301 = vmatpush.bf16.msra.mxu0 0
    %1302 = vmatpush.bf16.msra.mxu0 0
    %1303 = vmatpush.bf16.msra.mxu0 0
    %1304 = vmatpush.bf16.msra.mxu0 %v1269
    %1305 = vmatmul.bf16.gmra.mxu0 %v1262
    %v1306 = vpop.f32.mrf.mxu0
    %v1307 = vadd.f32 %v1254, %v1306
    %v1308 = vpop.f32.mrf.mxu0
    %1309 = vdwg.mxu0
    %v1310 = vmax.f32 %v1281, 0.0
    %v1311 = vmax.f32 %v1294, 0.0
    %v1312 = vmax.f32 %v1307, 0.0
    %v1313 = vadd.f32 %v1248, %v1310
    %v1314 = vadd.f32 %v1249, %v1311
    %v1315 = vadd.f32 %v1250, %v1312
    %v1316 = vmax.f32 %v1313, 0.0
    %v1317 = vmax.f32 %v1314, 0.0
    %v1318 = vmax.f32 %v1315, 0.0
    %v1319 = vperm.slane %v71, 7
    %v1320 = vperm.slane %v72, 7
    %v1321 = vperm.slane %v73, 7
    %v1322 = vmul.f32 %v1316, %v1319
    %v1323 = vmul.f32 %v1317, %v1320
    %v1324 = vmul.f32 %v1318, %v1321
    %v1325 = vadd.f32 %v1322, %v1323
    %v1326 = vadd.f32 %v1325, %v1324
    %1327 = vadd.xlane.f32.xlu0 %v1326
    %v1328 = vpop.xlane.xlu0 %1327
    %v1329 = vperm.slane %v75, 0
    %v1330 = vadd.f32 %v1328, %v1329
    %vm1331 = vcmask 7168
    %1332 = vst.msk [vmem:[%s6] sm:$0xff] %vm1331, %v1330
    // Predicated region
    $region38: #{tpu_custom_call.1} parent=1 // pred_check
      _
    $region39: #{tpu_custom_call.1} parent=1 // pred_check_branch
      %1334 = sbr.rel (0) target = $region41
    $region40: #{tpu_custom_call.1} parent=1 // pred_region
      _
    $region41: #{tpu_custom_call.1} parent=1 // pred_fallthru
      _
    // Predicated region
    $region42: #{tpu_custom_call.1} parent=1 // pred_check
      _
    $region43: #{tpu_custom_call.1} parent=1 // pred_check_branch
      %1336 = sbr.rel (0) target = $region45
    $region44: #{tpu_custom_call.1} parent=1 // pred_region
      _
    $region45: #{tpu_custom_call.1} parent=1 // pred_fallthru
      _
    %1337 = vsyncpa [#allocation3], 1
    %1338 = vsyncpa [#allocation5], 1

</llo_original>
